<compile_context>
chip_gen: v7x
topology: tpu7x:2x2x1
jax: 0.10.0
libtpu: 0.0.40
codegen_flags: <defaults>
</compile_context>

<pallas_src>
import math

import jax
import jax.numpy as jnp
from jax.experimental import pallas as pl
from jax.experimental.pallas import tpu as pltpu


def _make_pos_enc(d_model: int, max_seq_len: int, dtype=jnp.float32) -> jnp.ndarray:
    """Sinusoidal positional encoding matching the PyTorch __init__ (even d_model).

    Pass dtype=x.dtype (e.g. bf16) at module init to halve the PE HBM stream if the
    activations are not f32; the kernel upcasts to f32 for the add either way.
    """
    pos = jnp.arange(0, max_seq_len, dtype=jnp.float32)[:, None]              # [L, 1]
    div_term = jnp.exp(
        jnp.arange(0, d_model, 2, dtype=jnp.float32) * (-math.log(10000.0) / d_model)
    )                                                                          # [D/2]
    pe = jnp.zeros((max_seq_len, d_model), dtype=jnp.float32)
    pe = pe.at[:, 0::2].set(jnp.sin(pos * div_term))
    pe = pe.at[:, 1::2].set(jnp.cos(pos * div_term))
    return pe[None, :, :].astype(dtype)                                        # [1, L, D]


def _vmem_capacity_bytes() -> int:
    """Physical VMEM per TensorCore; conservative (v7x) fallback if query fails."""
    try:
        return int(pltpu.get_tpu_info().vmem_capacity_bytes)
    except Exception:  # e.g. interpret mode / non-TPU tracing
        return 64 << 20


def _largest_aligned_divisor(n: int, align: int, cap: int):
    """Largest d with d % align == 0, n % d == 0, d <= cap.  None if no such d."""
    top = (min(cap, n) // align) * align
    d = top
    while d >= align:
        if n % d == 0:
            return d
        d -= align
    return None


def _choose_block(n_rows: int, n_cols: int, itemsize: int, max_bytes: int):
    """Pick a (rows, cols) block for a 2-D elementwise kernel.

    Byte-based cap per pipeline buffer; rows rounded to the dtype's sublane
    multiple (8 f32 / 16 bf16 / 32 int8); prefers tile extents that divide the
    array extents so every block (and store) is full-width / unmasked.
    """
    max_elems = max(1, max_bytes // itemsize)
    sub = (32 // itemsize) * 8            # dtype sublane multiple

    # Whole problem in a single block.
    if n_rows * n_cols <= max_elems:
        return n_rows, n_cols

    # Full (lane-dense) rows, tile the row axis.
    if n_cols * sub <= max_elems:
        cap_rows = max_elems // n_cols
        tr = _largest_aligned_divisor(n_rows, sub, cap_rows)
        if tr is None:                    # no aligned divisor: aligned tr, masked tail
            tr = min(n_rows, (cap_rows // sub) * sub)
        return tr, n_cols

    # Rows are very long: tile the column axis too (multiple of 128, divisor of C).
    tr = min(n_rows, sub)
    cap_cols = max(128, (max_elems // tr) // 128 * 128)
    tc = _largest_aligned_divisor(n_cols, 128, cap_cols)
    if tc is None:
        tc = cap_cols                     # lane-aligned; trailing block masked (rare)
    return tr, tc


def _add_pos_enc_kernel(x_ref, pe_ref, o_ref):
    # x_ref / o_ref: (tr, tc) row-tile of the flattened [B, S*D] activations.
    # pe_ref:        (1, tc) PE tile (or the full (1, L*D) buffer in the rare
    #                non-lane-aligned single-block case; statically sliced here).
    w = o_ref.shape[1]
    x = x_ref[...].astype(jnp.float32)
    pe = pe_ref[:, :w].astype(jnp.float32)
    o_ref[...] = (x + pe).astype(o_ref.dtype)


def positional_encoding_forward(
    x: jnp.ndarray,
    pos_enc: jnp.ndarray,
    *,
    force_pallas: bool = False,
    alias_x: bool = False,
) -> jnp.ndarray:
    """x: [B, S, D]; pos_enc: [1, L, D] with L >= S. Returns x + pos_enc[:, :S, :].

    alias_x=True aliases x to the output (input_output_aliases={0: 0}); this only
    avoids an extra HBM round trip if the CALLER DONATES x (jax.jit donate_argnums),
    otherwise XLA inserts a defensive copy — leave it False unless x is donated.
    """
    B, S, D = x.shape
    _, L, D_pe = pos_enc.shape
    assert D_pe == D, "d_model mismatch between x and pos_enc"
    assert S <= L, "sequence length exceeds max_seq_len of the positional encoding"

    itemsize = x.dtype.itemsize
    C = S * D
    total_bytes = B * C * itemsize

    # Small shapes: a standalone pallas_call is ~100% dispatch/per-step overhead;
    # let XLA fuse the add into neighbouring ops instead.
    if not force_pallas and total_bytes < (256 << 10):
        return x + pos_enc[:, :S, :].astype(x.dtype) if pos_enc.dtype != x.dtype \
            else x + pos_enc[:, :S, :]

    # Generation-aware budgets: 64 MiB VMEM (v7x) -> 8 MiB tiles / 48 MiB limit;
    # 128 MiB VMEM (v5e/v6e) -> 16 MiB tiles / 64 MiB limit.
    vmem_cap = _vmem_capacity_bytes()
    big_vmem = vmem_cap >= (128 << 20)
    max_tile_bytes = (16 << 20) if big_vmem else (8 << 20)
    vmem_limit = min((64 << 20) if big_vmem else (48 << 20), vmem_cap)

    x2 = x.reshape(B, C)                  # lane-dense 2-D view (metadata only)
    pe2 = pos_enc.reshape(1, L * D)       # full PE buffer; columns picked by BlockSpec

    tr, tc = _choose_block(B, C, itemsize, max_tile_bytes)

    # Megacore: if a DMA-heavy problem fits one block, split the outer ("parallel")
    # column axis in two so both TensorCores (v7x) get a step, keeping lane density.
    if tr == B and tc == C and total_bytes >= (1 << 20) and C % 256 == 0:
        tc = C // 2

    # Positional-encoding BlockSpec (constant along the inner batch axis -> resident).
    if tc == C:
        if C % 128 == 0 or C == L * D:
            pe_spec = pl.BlockSpec((1, C), lambda j, b: (0, 0))
        elif L * D * pos_enc.dtype.itemsize <= (4 << 20):
            # Keep the whole PE buffer resident; kernel statically slices [:, :C].
            pe_spec = pl.BlockSpec((1, L * D), lambda j, b: (0, 0))
        else:
            # Rare: non-lane-aligned C AND a huge PE table -> one-time wrapper slice.
            pe2 = pos_enc[:, :S, :].reshape(1, C)
            pe_spec = pl.BlockSpec((1, C), lambda j, b: (0, 0))
    else:
        # tc is a multiple of 128 by construction here.
        pe_spec = pl.BlockSpec((1, tc), lambda j, b: (0, j))

    # Row (batch) axis innermost so the PE block index is constant along it.
    grid = (pl.cdiv(C, tc), pl.cdiv(B, tr))

    extra = {}
    if alias_x:
        extra["input_output_aliases"] = {0: 0}

    out2 = pl.pallas_call(
        _add_pos_enc_kernel,
        out_shape=jax.ShapeDtypeStruct((B, C), x.dtype),
        grid_spec=pltpu.PrefetchScalarGridSpec(
            num_scalar_prefetch=0,
            grid=grid,
            in_specs=[
                pl.BlockSpec((tr, tc), lambda j, b: (b, j)),   # x row-tile
                pe_spec,                                       # PE tile (row-resident)
            ],
            out_specs=pl.BlockSpec((tr, tc), lambda j, b: (b, j)),
        ),
        compiler_params=pltpu.CompilerParams(
            dimension_semantics=("parallel", "parallel"),
            vmem_limit_bytes=vmem_limit,
        ),
        **extra,
    )(x2, pe2)

    return out2.reshape(B, S, D)


if __name__ == "__main__":
    # Small shapes consistent with the module: d_model=32, max_seq_len=8, seq=8, batch=2
    d_model = 32
    max_seq_len = 8
    batch = 2
    seq = 8

    pos_enc = _make_pos_enc(d_model, max_seq_len)              # [1, 8, 32] f32

    key = jax.random.PRNGKey(0)
    x = jax.random.normal(key, (batch, seq, d_model), dtype=jnp.float32)

    # Reference (same semantics as the PyTorch forward).
    ref = x + pos_enc[:, :seq, :]

    # force_pallas=True so the Pallas kernel itself runs even at this tiny size
    # (the wrapper would otherwise fall back to the fused XLA add).
    out = positional_encoding_forward(x, pos_enc, force_pallas=True)
    out = jax.block_until_ready(out)

    assert out.shape == (batch, seq, d_model)
    assert jnp.allclose(out, ref, atol=1e-6), "mismatch vs reference"

    print("KERNEL_OK")
</pallas_src>

<mosaic_0001>
module attributes {stable_mosaic.version = 11 : i64} {
  func.func @_add_pos_enc_kernel(%arg0: i32, %arg1: i32, %arg2: memref<2x256xf32, #tpu.memory_space<vmem>>, %arg3: memref<1x256xf32, #tpu.memory_space<vmem>>, %arg4: memref<2x256xf32, #tpu.memory_space<vmem>>) attributes {dimension_semantics = [#tpu.dimension_semantics<parallel>, #tpu.dimension_semantics<parallel>], iteration_bounds = array<i64: 1, 1>, scalar_prefetch = 0 : i64, scratch_operands = 0 : i64, tpu.core_type = #tpu.core_type<tc>, window_params = [{transform_indices = @transform_0, window_bounds = array<i64: 2, 256>}, {pipeline_mode = #tpu.pipeline_mode<synchronous>, transform_indices = @transform_1, window_bounds = array<i64: 1, 256>}, {transform_indices = @transform_2, window_bounds = array<i64: 2, 256>}]} {
    %c0 = arith.constant 0 : index
    %c0_0 = arith.constant 0 : index
    %0 = vector.load %arg2[%c0, %c0_0] : memref<2x256xf32, #tpu.memory_space<vmem>>, vector<2x256xf32>
    %c0_1 = arith.constant 0 : index
    %c0_2 = arith.constant 0 : index
    %1 = vector.load %arg3[%c0_1, %c0_2] : memref<1x256xf32, #tpu.memory_space<vmem>>, vector<1x256xf32>
    %2 = vector.broadcast %1 : vector<1x256xf32> to vector<2x256xf32>
    %3 = arith.addf %0, %2 : vector<2x256xf32>
    %c0_3 = arith.constant 0 : index
    %c0_4 = arith.constant 0 : index
    %4 = vector.load %arg4[%c0_3, %c0_4] : memref<2x256xf32, #tpu.memory_space<vmem>>, vector<2x256xf32>
    tpu.vector_store %arg4[%c0_3, %c0_4], %3 {strides = array<i32>} : memref<2x256xf32, #tpu.memory_space<vmem>>, vector<2x256xf32>,
    return
  }
  func.func @transform_0(%arg0: i32, %arg1: i32) -> (i32, i32) {
    %c0_i32 = arith.constant 0 : i32
    return %arg1, %arg0 : i32, i32
  }
  func.func @transform_1(%arg0: i32, %arg1: i32) -> (i32, i32) {
    %c0_i32 = arith.constant 0 : i32
    %c0_i32_0 = arith.constant 0 : i32
    %c0_i32_1 = arith.constant 0 : i32
    return %c0_i32, %c0_i32_0 : i32, i32
  }
  func.func @transform_2(%arg0: i32, %arg1: i32) -> (i32, i32) {
    %c0_i32 = arith.constant 0 : i32
    return %arg1, %arg0 : i32, i32
  }
}

</mosaic_0001>

<llo_original>
// kernel: tpu_custom_call.1
$region0: #{tpu_custom_call.1}
  #allocation0 [shape = 'u32[]', space=smem, size = 0x4, offset = 0x4, fixed_abs, tag = 'smem constant byte address 0x4 - core index']
  #allocation1 [shape = 'u32[144,128]{1,0:T(1,128)}', space=vmem, size = 0x12000, scoped, tag = 'internal scratch']
  %s0 = inlined_call_operand.hbm [shape: f32[2,256], index: 0, kind: input, shape index: {}]
  %s1 = inlined_call_operand.vmem [shape: f32[1,256], index: 1, kind: input, shape index: {}]
  %s2 = inlined_call_operand.hbm [shape: f32[2,256], index: 2, kind: output, shape index: {}]
  %s3 = sld [smem:[#allocation0]]
  $region22: #{tpu_custom_call.1} parent=0
    _
  %s5 = ssub.s32 1, %s3
  %s6 = scalar_select 0, %s5, %s3
  $region1: #{tpu_custom_call.1} parent=0
    #allocation2 [shape = 'u8[2048]{0}', space=vmem, size = 0x800, scoped, tag = 'input window, operand 0, single buffered']
    #allocation3 [shape = 's32[1]{0}', space=sflag, size = 0x4, scoped, tag = 'scoped memory for tpu_custom_call.1']
    #allocation4 [shape = 's32[1]{0}', space=sflag, size = 0x4, scoped, tag = 'scoped memory for tpu_custom_call.1']
    #allocation5 [shape = 'u8[2048]{0}', space=vmem, size = 0x800, scoped, tag = 'output window, operand 0, single buffered']
    %7 = vsyncpa [#allocation3], 0
    %8 = vsyncpa [#allocation4], 0
    // Predicated region
    $region2: #{tpu_custom_call.1} parent=1 // pred_check
      _
    $region3: #{tpu_custom_call.1} parent=1 // pred_check_branch
      %10 = sbr.rel (0) target = $region5
    $region4: #{tpu_custom_call.1} parent=1 // pred_region
      %s12 = ssub.s32 64, 64
      %13 = vsyncadd [#allocation3], %s12
      %s15 = sshll.u32 [#allocation2], 4
      %s16 = int_to_ptr.vmem [resolvable:$true] %s15
      %18 = dma.hbm_to_vmem [thread:$0]  %s0, 64, %s16, [#allocation3]
    $region5: #{tpu_custom_call.1} parent=1 // pred_fallthru
      _
    // Predicated region
    $region6: #{tpu_custom_call.1} parent=1 // pred_check
      _
    $region7: #{tpu_custom_call.1} parent=1 // pred_check_branch
      %20 = sbr.rel (0) target = $region9
    $region8: #{tpu_custom_call.1} parent=1 // pred_region
      _
    $region9: #{tpu_custom_call.1} parent=1 // pred_fallthru
      _
    // Predicated region
    $region10: #{tpu_custom_call.1} parent=1 // pred_check
      _
    $region11: #{tpu_custom_call.1} parent=1 // pred_check_branch
      %22 = sbr.rel (0) target = $region13
    $region12: #{tpu_custom_call.1} parent=1 // pred_region
      %23 = dma.done [#allocation3], 64
    $region13: #{tpu_custom_call.1} parent=1 // pred_fallthru
      _
    %v24 = vld [vmem:[#allocation2] sm:$0xf]
    %v25 = vld [vmem:[%s1] sm:$0x3]
    %v27 = vlaneseq
    %v28 = vshrl.u32 %v27, 7
    %v29 = vsub.s32 0, %v28
    %v30 = vrot.slane %v25, %v29
    %v31 = vlaneseq
    %v32 = vshrl.u32 %v31, 7
    %v33 = vsub.s32 1, %v32
    %v34 = vrot.slane %v25, %v33
    %v35 = vcombine.low %v30, %v34
    %v37 = vunpack.c.l.s4 1983009808
    %v38 = vunpack.c.0.s8 %v37
    %v39 = vlaneseq
    %v40 = vshrl.u32 %v39, 7
    %v41 = vsub.s32 %v38, %v40
    %v42 = vrot.slane %v35, %v41
    %v44 = vadd.f32 %v24, %v42
    %45 = vst [vmem:[#allocation5] sm:$0xf] %v44
    // Predicated region
    $region14: #{tpu_custom_call.1} parent=1 // pred_check
      _
    $region15: #{tpu_custom_call.1} parent=1 // pred_check_branch
      %47 = sbr.rel (0) target = $region17
    $region16: #{tpu_custom_call.1} parent=1 // pred_region
      %s49 = ssub.s32 64, 64
      %50 = vsyncadd [#allocation4], %s49
      %s52 = sshll.u32 [#allocation5], 4
      %s53 = int_to_ptr.vmem [resolvable:$true] %s52
      %55 = dma.vmem_to_hbm [thread:$0]  %s53, 64, %s2, [#allocation4]
    $region17: #{tpu_custom_call.1} parent=1 // pred_fallthru
      _
    // Predicated region
    $region18: #{tpu_custom_call.1} parent=1 // pred_check
      _
    $region19: #{tpu_custom_call.1} parent=1 // pred_check_branch
      %57 = sbr.rel (0) target = $region21
    $region20: #{tpu_custom_call.1} parent=1 // pred_region
      %58 = dma.done [#allocation4], 64
    $region21: #{tpu_custom_call.1} parent=1 // pred_fallthru
      _
    %59 = vsyncpa [#allocation3], 1
    %60 = vsyncpa [#allocation4], 1

</llo_original>
